<compile_context>
chip_gen: v5e
topology: v5e:2x2
jax: 0.10.0
libtpu: 0.0.40
codegen_flags: <defaults>
</compile_context>

<pallas_src>
from functools import partial

import jax
import jax.numpy as jnp
from jax.experimental import pallas as pl
from jax.experimental.pallas import tpu as pltpu

_LANE = 128
_SUBLANE = 8
# ~2 MiB per block: amortizes per-step overhead (measured copy kernels hit
# ~85% of HBM roofline at >=512-row f32 tiles) and stays VMEM-safe on
# v5e / v6e / v7x with default double buffering.
_BLOCK_BYTES = 2 * 1024 * 1024


def _copy_kernel(x_ref, o_ref):
    # Identity copy of one lane-dense tile — the entire "compute" of view().
    o_ref[...] = x_ref[...]


def _identity_copy_2d(x2):
    """Tiled identity copy of a (rows, 128) lane-dense array."""
    rows, lanes = x2.shape
    itemsize = jnp.dtype(x2.dtype).itemsize
    # Largest multiple-of-8 row count whose tile is <= ~2 MiB.
    max_rows = max(
        _SUBLANE,
        (_BLOCK_BYTES // (lanes * itemsize)) // _SUBLANE * _SUBLANE,
    )
    block_rows = min(max_rows, rows)  # rows is a multiple of 8 (guaranteed by caller)
    grid = (pl.cdiv(rows, block_rows),)

    return pl.pallas_call(
        _copy_kernel,
        out_shape=jax.ShapeDtypeStruct((rows, lanes), x2.dtype),
        grid=grid,
        in_specs=[pl.BlockSpec((block_rows, lanes), lambda i: (i, 0))],
        out_specs=pl.BlockSpec((block_rows, lanes), lambda i: (i, 0)),
        input_output_aliases={0: 0},
        compiler_params=pltpu.CompilerParams(
            dimension_semantics=("parallel",)
        ),
    )(x2)


@partial(jax.jit, static_argnames=("size",))
def pallas_view(x, size):
    """Equivalent of torch.Tensor.view(size) for contiguous tensors."""
    n = x.size
    if n % (_SUBLANE * _LANE) == 0 and n > 0:
        # Lane-dense arrangement of the flat element stream; metadata-only
        # reshape under jit (no pad, no slice).
        x2 = x.reshape(n // _LANE, _LANE)
        out2 = _identity_copy_2d(x2)
        return out2.reshape(size)
    # Ragged element count: torch.view is metadata-only on contiguous tensors,
    # so the exact semantic equivalent is a metadata-only reshape — no kernel,
    # no bytes moved.
    return jnp.reshape(x, size)


class View:
    """JAX/Pallas counterpart of the PyTorch View module."""

    def __init__(self, size):
        self.size = tuple(size) if isinstance(size, (list, tuple)) else (size,)

    def __call__(self, tensor):
        return pallas_view(tensor, self.size)


if __name__ == "__main__":
    key = jax.random.PRNGKey(0)
    # Small NCHW input consistent with View's use in eeg_networks:
    # flattening conv feature maps before a linear layer.
    x = jax.random.normal(key, (2, 4, 16, 16), dtype=jnp.float32)

    target_size = (2, -1)  # flatten per-sample
    ref = x.reshape(target_size)  # reference (torch.view == row-major reshape)

    view_mod = View(target_size)
    y = jax.block_until_ready(view_mod(x))

    assert y.shape == ref.shape, (y.shape, ref.shape)
    assert y.dtype == ref.dtype
    assert bool(jnp.array_equal(y, ref))

    print("KERNEL_OK")
</pallas_src>

<mosaic_0001>
module attributes {stable_mosaic.version = 11 : i64} {
  func.func @_copy_kernel(%arg0: i32, %arg1: memref<16x128xf32, #tpu.memory_space<vmem>>, %arg2: memref<16x128xf32, #tpu.memory_space<vmem>>) attributes {dimension_semantics = [#tpu.dimension_semantics<parallel>], iteration_bounds = array<i64: 1>, scalar_prefetch = 0 : i64, scratch_operands = 0 : i64, tpu.core_type = #tpu.core_type<tc>, window_params = [{transform_indices = @transform_0, window_bounds = array<i64: 16, 128>}, {transform_indices = @transform_1, window_bounds = array<i64: 16, 128>}]} {
    %c0 = arith.constant 0 : index
    %c0_0 = arith.constant 0 : index
    %0 = vector.load %arg1[%c0, %c0_0] : memref<16x128xf32, #tpu.memory_space<vmem>>, vector<16x128xf32>
    %c0_1 = arith.constant 0 : index
    %c0_2 = arith.constant 0 : index
    %1 = vector.load %arg2[%c0_1, %c0_2] : memref<16x128xf32, #tpu.memory_space<vmem>>, vector<16x128xf32>
    tpu.vector_store %arg2[%c0_1, %c0_2], %0 {strides = array<i32>} : memref<16x128xf32, #tpu.memory_space<vmem>>, vector<16x128xf32>,
    return
  }
  func.func @transform_0(%arg0: i32) -> (i32, i32) {
    %c0_i32 = arith.constant 0 : i32
    %c0_i32_0 = arith.constant 0 : i32
    return %arg0, %c0_i32 : i32, i32
  }
  func.func @transform_1(%arg0: i32) -> (i32, i32) {
    %c0_i32 = arith.constant 0 : i32
    %c0_i32_0 = arith.constant 0 : i32
    return %arg0, %c0_i32 : i32, i32
  }
}

</mosaic_0001>

<llo_original>
// kernel: pallas_view.1
$region0: #{pallas_view.1}
  #allocation0 [shape = 'u32[]', space=smem, size = 0x4, offset = 0x4, fixed_abs, tag = 'smem constant byte address 0x4 - core index']
  #allocation1 [shape = 'u32[72,128]{1,0:T(1,128)}', space=vmem, size = 0x9000, scoped, tag = 'internal scratch']
  %s0 = inlined_call_operand.vmem [shape: f32[16,128], index: 0, kind: input, shape index: {}, may-alias: {0,1}]
  %s1 = inlined_call_operand.vmem [shape: f32[16,128], index: 1, kind: output, shape index: {}, may-alias: {0,1}]
  %s2 = sld [smem:[#allocation0]]
  $region14: #{pallas_view.1} parent=0
    _
  %s4 = ssub.s32 1, %s2
  %s5 = scalar_select 0, %s4, %s2
  // Predicated region
  $region2: #{pallas_view.1} parent=0 // pred_check
    _
  $region3: #{pallas_view.1} parent=0 // pred_check_branch
    %7 = sbr.rel (0) target = $region5
  $region4: #{pallas_view.1} parent=0 // pred_region
    _
  $region5: #{pallas_view.1} parent=0 // pred_fallthru
    _
  %v8 = vld [vmem:[%s0] sm:$0xff]
  %v9 = vld [vmem:[%s0 + $0x8] sm:$0xff]
  %10 = vst [vmem:[%s1] sm:$0xff] %v8
  %11 = vst [vmem:[%s1 + $0x8] sm:$0xff] %v9
  // Predicated region
  $region6: #{pallas_view.1} parent=0 // pred_check
    _
  $region7: #{pallas_view.1} parent=0 // pred_check_branch
    %13 = sbr.rel (0) target = $region9
  $region8: #{pallas_view.1} parent=0 // pred_region
    _
  $region9: #{pallas_view.1} parent=0 // pred_fallthru
    _
  // Predicated region
  $region10: #{pallas_view.1} parent=0 // pred_check
    _
  $region11: #{pallas_view.1} parent=0 // pred_check_branch
    %15 = sbr.rel (0) target = $region13
  $region12: #{pallas_view.1} parent=0 // pred_region
    _
  $region13: #{pallas_view.1} parent=0 // pred_fallthru
    _

</llo_original>
